<compile_context>
chip_gen: v6e
topology: v6e:2x2x1
jax: 0.10.0
libtpu: 0.0.40
codegen_flags: <defaults>
</compile_context>

<pallas_src>
import functools

import jax
import jax.numpy as jnp
from jax.experimental import pallas as pl
from jax.experimental.pallas import tpu as pltpu


def _pos_embed_kernel(emb_ref, out_ref, *, width):
    """Writes one channel half per grid step, directly in (F, HWp) layout.

    emb_ref: (F, S)   step 0 -> col_embed[:W].T, step 1 -> row_embed[:H].T
                      (both zero-padded to S = max(H, W) lanes)
    out_ref: (F, HWp) flattened spatial dim, lane-padded to a multiple of 128

      step 0: out[c, h*W + w] = emb[c, w]
      step 1: out[c, h*W + w] = emb[c, h]
    """
    step = pl.program_id(0)                 # 0 -> col (x) half, 1 -> row (y) half
    S = emb_ref.shape[1]
    hwp = out_ref.shape[1]

    lane = jax.lax.broadcasted_iota(jnp.int32, (S, hwp), 1)   # flat spatial j
    sub = jax.lax.broadcasted_iota(jnp.int32, (S, hwp), 0)    # table row s

    # Exact floor(j / W) without vector integer division: W is a compile-time
    # constant, j < 2^13, so the f32 computation below is exact.
    j_div_w = jnp.floor(
        (lane.astype(jnp.float32) + 0.5) * (1.0 / width)
    ).astype(jnp.int32)
    # step 0 selects on w = j % W, step 1 selects on h = j // W.
    key = jnp.where(step == 0, lane - j_div_w * width, j_div_w)
    onehot = jnp.where(key == sub, 1.0, 0.0)                  # (S, HWp) f32 0/1

    # Idle-MXU "gather": (F, S) @ (S, HWp) -> (F, HWp), already lane-dense.
    half = jnp.dot(emb_ref[...], onehot, preferred_element_type=jnp.float32)
    out_ref[...] = half.astype(out_ref.dtype)


def position_embedding_learned(x, col_weight, row_weight, *, out_dtype=jnp.float32):
    """Pallas forward of PositionEmbeddingLearned.

    x:          (B, C, H, W)   -- only the shape is used
    col_weight: (50, F)
    row_weight: (50, F)
    returns:    (B, 2F, H, W) out_dtype
    """
    B = x.shape[0]
    H, W = x.shape[-2:]
    F = col_weight.shape[1]
    if row_weight.shape[1] != F:
        raise ValueError("row/col embedding tables must share the feature dim")
    if W > col_weight.shape[0] or H > row_weight.shape[0]:
        raise ValueError(
            f"spatial size (H={H}, W={W}) exceeds embedding table rows "
            f"({row_weight.shape[0]}, {col_weight.shape[0]})")
    if F % 8 != 0:
        raise ValueError("num_pos_feats must be a multiple of 8 (sublane tiling)")

    S = max(H, W)
    hw = H * W
    hwp = pl.cdiv(hw, 128) * 128        # lane-pad -> unmasked full-width stores

    # Embedding lookup (arange indices == static row slice) + transpose done
    # once in XLA on the tiny (<=50, F) tables; stacked so each grid step DMAs
    # exactly the half it needs.
    col_t = jnp.pad(col_weight[:W].T, ((0, 0), (0, S - W)))   # (F, S)
    row_t = jnp.pad(row_weight[:H].T, ((0, 0), (0, S - H)))   # (F, S)
    emb = jnp.stack([col_t, row_t], axis=0)                   # (2, F, S)

    out_bytes = 2 * F * hwp * jnp.dtype(out_dtype).itemsize
    out2d = pl.pallas_call(
        functools.partial(_pos_embed_kernel, width=W),
        out_shape=jax.ShapeDtypeStruct((2 * F, hwp), out_dtype),
        grid=(2,),
        in_specs=[
            pl.BlockSpec((None, F, S), lambda i: (i, 0, 0),
                         memory_space=pltpu.MemorySpace.VMEM),
        ],
        out_specs=pl.BlockSpec((F, hwp), lambda i: (i, 0),
                               memory_space=pltpu.MemorySpace.VMEM),
        compiler_params=pltpu.CompilerParams(
            dimension_semantics=("parallel",)),   # v7x: one half per TensorCore
        cost_estimate=pl.CostEstimate(
            flops=2 * (2 * F) * S * hwp,          # two (F,S)@(S,HWp) matmuls
            transcendentals=0,
            bytes_accessed=out_bytes + 2 * F * S * 4,
        ),
    )(emb)

    if hwp != hw:
        out2d = out2d[:, :hw]
    # (2F, H*W) -> (1, 2F, H, W) is a free contiguous reshape.
    pos = out2d.reshape(1, 2 * F, H, W)
    # Module parity requires a (B, ...) result.  NOTE: if this is a jit output
    # or feeds a non-fusible consumer, XLA materializes B copies in HBM; when
    # possible keep the (1, ...) tensor and let the consumer's add broadcast it.
    return jnp.broadcast_to(pos, (B, 2 * F, H, W))


def _reference(x, col_weight, row_weight):
    B, _, H, W = x.shape
    F = col_weight.shape[1]
    x_emb = col_weight[:W]                                  # (W, F)
    y_emb = row_weight[:H]                                  # (H, F)
    pos = jnp.concatenate(
        [
            jnp.broadcast_to(x_emb[None, :, :], (H, W, F)),
            jnp.broadcast_to(y_emb[:, None, :], (H, W, F)),
        ],
        axis=-1,
    )                                                       # (H, W, 2F)
    pos = jnp.transpose(pos, (2, 0, 1))[None]               # (1, 2F, H, W)
    return jnp.broadcast_to(pos, (B, 2 * F, H, W))


if __name__ == "__main__":
    key = jax.random.PRNGKey(0)
    k_x, k_col, k_row = jax.random.split(key, 3)

    # Small shapes consistent with the module's forward (H, W <= 50).
    B, C, H, W = 2, 4, 16, 16
    num_pos_feats = 32

    x = jax.random.normal(k_x, (B, C, H, W), dtype=jnp.float32)
    # nn.init.uniform_ -> U[0, 1), embedding tables of shape (50, num_pos_feats)
    col_weight = jax.random.uniform(k_col, (50, num_pos_feats), dtype=jnp.float32)
    row_weight = jax.random.uniform(k_row, (50, num_pos_feats), dtype=jnp.float32)

    out = position_embedding_learned(x, col_weight, row_weight)
    out = jax.block_until_ready(out)

    ref = _reference(x, col_weight, row_weight)
    assert out.shape == (B, 2 * num_pos_feats, H, W), out.shape
    assert jnp.allclose(out, ref, atol=1e-6), "mismatch vs reference"

    print("KERNEL_OK")
</pallas_src>

<mosaic_0001>
module attributes {stable_mosaic.version = 11 : i64} {
  func.func @_pos_embed_kernel(%arg0: i32, %arg1: memref<1x32x16xf32, #tpu.memory_space<vmem>>, %arg2: memref<32x256xf32, #tpu.memory_space<vmem>>) attributes {dimension_semantics = [#tpu.dimension_semantics<parallel>], iteration_bounds = array<i64: 2>, scalar_prefetch = 0 : i64, scratch_operands = 0 : i64, tpu.core_type = #tpu.core_type<tc>, window_params = [{transform_indices = @transform_0, window_bounds = array<i64: 1, 32, 16>}, {transform_indices = @transform_1, window_bounds = array<i64: 32, 256>}]} {
    %0 = tpu.iota {dimensions = array<i32: 1>} : vector<16x256xi32>
    %1 = tpu.iota {dimensions = array<i32: 0>} : vector<16x256xi32>
    %2 = arith.sitofp %0 : vector<16x256xi32> to vector<16x256xf32>
    %cst = arith.constant 5.000000e-01 : f32
    %3 = vector.broadcast %cst : f32 to vector<16x256xf32>
    %4 = arith.addf %2, %3 : vector<16x256xf32>
    %cst_0 = arith.constant 6.250000e-02 : f32
    %5 = vector.broadcast %cst_0 : f32 to vector<16x256xf32>
    %6 = arith.mulf %4, %5 : vector<16x256xf32>
    %7 = math.floor %6 : vector<16x256xf32>
    %8 = arith.fptosi %7 : vector<16x256xf32> to vector<16x256xi32>
    %c0_i32 = arith.constant 0 : i32
    %9 = arith.cmpi eq, %arg0, %c0_i32 : i32
    %c16_i32 = arith.constant 16 : i32
    %10 = vector.broadcast %c16_i32 : i32 to vector<16x256xi32>
    %11 = arith.muli %8, %10 : vector<16x256xi32>
    %12 = arith.subi %0, %11 : vector<16x256xi32>
    %13 = arith.select %9, %12, %8 : vector<16x256xi32>
    %14 = arith.cmpi eq, %13, %1 : vector<16x256xi32>
    %cst_1 = arith.constant 1.000000e+00 : f32
    %cst_2 = arith.constant 0.000000e+00 : f32
    %15 = vector.broadcast %cst_1 : f32 to vector<16x256xf32>
    %16 = vector.broadcast %cst_2 : f32 to vector<16x256xf32>
    %17 = arith.select %14, %15, %16 : vector<16x256xi1>, vector<16x256xf32>
    %c0 = arith.constant 0 : index
    %c0_3 = arith.constant 0 : index
    %c0_4 = arith.constant 0 : index
    %18 = vector.load %arg1[%c0, %c0_3, %c0_4] : memref<1x32x16xf32, #tpu.memory_space<vmem>>, vector<1x32x16xf32>
    %19 = vector.shape_cast %18 : vector<1x32x16xf32> to vector<32x16xf32>
    %cst_5 = arith.constant dense<0.000000e+00> : vector<32x256xf32>
    %20 = tpu.matmul %19, %17, %cst_5 {dimension_numbers = #tpu.dot_dimension_numbers<[1], [0], [0], [1], [0, 0, 1, 1], [], []>} : vector<32x16xf32>, vector<16x256xf32>, vector<32x256xf32> -> vector<32x256xf32>
    %c0_6 = arith.constant 0 : index
    %c0_7 = arith.constant 0 : index
    %21 = vector.load %arg2[%c0_6, %c0_7] : memref<32x256xf32, #tpu.memory_space<vmem>>, vector<32x256xf32>
    tpu.vector_store %arg2[%c0_6, %c0_7], %20 {strides = array<i32>} : memref<32x256xf32, #tpu.memory_space<vmem>>, vector<32x256xf32>,
    return
  }
  func.func @transform_0(%arg0: i32) -> (i32, i32, i32) {
    %c0_i32 = arith.constant 0 : i32
    %c0_i32_0 = arith.constant 0 : i32
    %c0_i32_1 = arith.constant 0 : i32
    return %arg0, %c0_i32, %c0_i32_0 : i32, i32, i32
  }
  func.func @transform_1(%arg0: i32) -> (i32, i32) {
    %c0_i32 = arith.constant 0 : i32
    %c0_i32_0 = arith.constant 0 : i32
    return %arg0, %c0_i32 : i32, i32
  }
}

</mosaic_0001>

<llo_original>
// kernel: tpu_custom_call.1
$region0: #{tpu_custom_call.1}
  #allocation0 [shape = 'u32[]', space=smem, size = 0x4, offset = 0x4, fixed_abs, tag = 'smem constant byte address 0x4 - core index']
  #allocation1 [shape = 'u32[144,128]{1,0:T(1,128)}', space=vmem, size = 0x12000, scoped, tag = 'internal scratch']
  %s0 = inlined_call_operand.vmem [shape: f32[2,32,16], index: 0, kind: input, shape index: {}]
  %s1 = inlined_call_operand.hbm [shape: f32[64,256], index: 1, kind: output, shape index: {}]
  %s2 = sld [smem:[#allocation0]]
  $region37: #{tpu_custom_call.1} parent=0
    _
  %s4 = ssub.s32 1, %s2
  %s5 = scalar_select 0, %s4, %s2
  $region1: #{tpu_custom_call.1} parent=0
    #allocation2 [shape = 'u8[65536]{0}', space=vmem, size = 0x10000, scoped, tag = 'output window, operand 0']
    #allocation3 [shape = 's32[2]{0}', space=sflag, size = 0x8, scoped, tag = 'scoped memory for tpu_custom_call.1']
    %6 = vsyncpa [#allocation3], 0
    %s7 = scalar_lea.sflag [#allocation3], 1
    %8 = vsyncpa %s7, 0
    loop: start=0, step=1, limit=4
    $region2: #{tpu_custom_call.1} parent=1 // loop_pre_header
      _
    $region3: #{tpu_custom_call.1} parent=1 // loop_header
      %s10 = sphi 0, %s14
      %p11 = scmp.ge.s32.totalorder %s10, 4
      %s20 = sphi 0, %s22
      %s23 = sphi 0, %s20
      %s24 = sphi 0, %s23
      %s40 = sphi 0, %s24
      %s46 = sphi 0, %s48
      %s49 = sphi 0, %s46
      %s50 = sphi 0, %s49
      %s66 = sphi 0, %s50
    $region4: #{tpu_custom_call.1} parent=1 // loop_header_branch
      %13 = sbr.rel (%p11) target = $region8
    $region5: #{tpu_custom_call.1} parent=1 // loop_body
      %s15 = ssub.s32 %s10, 1
      %s16 = ssub.s32 %s10, 2
      %s17 = sadd.s32 %s10, 1
      %s18 = ssub.s32 %s10, %s17
      %p19 = scmp.eq.s32.totalorder %s18, 0
      %s21 = sadd.s32 %s20, 1
      %s22 = scalar_select %p19, %s20, %s21
      %p25 = pneg %p19
      %p26 = scmp.eq.s32.totalorder %s10, 1
      %p27 = por %p25, %p26
      %p28 = scmp.ne.s32.totalorder %s20, %s23
      %p29 = scmp.eq.s32.totalorder %s10, 0
      %p30 = por %p28, %p29
      %p31 = scmp.ne.s32.totalorder %s20, %s23
      %p32 = scmp.eq.s32.totalorder %s15, 1
      %p33 = por %p31, %p32
      %p34 = scmp.ne.s32.totalorder %s23, %s24
      %p35 = scmp.eq.s32.totalorder %s15, 0
      %p36 = por %p34, %p35
      %p37 = scmp.ne.s32.totalorder %s23, %s24
      %p38 = scmp.eq.s32.totalorder %s16, 1
      %p39 = por %p37, %p38
      %p41 = scmp.ne.s32.totalorder %s24, %s40
      %p42 = scmp.eq.s32.totalorder %s16, 0
      %p43 = por %p41, %p42
      %s44 = ssub.s32 %s10, %s17
      %p45 = scmp.eq.s32.totalorder %s44, 0
      %s47 = sadd.s32 %s46, 1
      %s48 = scalar_select %p45, %s46, %s47
      %p51 = pneg %p45
      %p52 = scmp.eq.s32.totalorder %s10, 1
      %p53 = por %p51, %p52
      %p54 = scmp.ne.s32.totalorder %s46, %s49
      %p55 = scmp.eq.s32.totalorder %s10, 0
      %p56 = por %p54, %p55
      %p57 = scmp.ne.s32.totalorder %s46, %s49
      %p58 = scmp.eq.s32.totalorder %s15, 1
      %p59 = por %p57, %p58
      %p60 = scmp.ne.s32.totalorder %s49, %s50
      %p61 = scmp.eq.s32.totalorder %s15, 0
      %p62 = por %p60, %p61
      %p63 = scmp.ne.s32.totalorder %s49, %s50
      %p64 = scmp.eq.s32.totalorder %s16, 1
      %p65 = por %p63, %p64
      %p67 = scmp.ne.s32.totalorder %s50, %s66
      %p68 = scmp.eq.s32.totalorder %s16, 0
      %p69 = por %p67, %p68
      %p70 = scmp.le.s32.totalorder 1, %s10
      %p71 = scmp.lt.s32.totalorder %s10, 3
      %p72 = pnand %p70, %p71
      %p73 = pneg %p72
      // Predicated region
      $region9: #{tpu_custom_call.1} parent=5 // pred_check
        _
      $region10: #{tpu_custom_call.1} parent=5 // pred_check_branch
        %75 = sbr.rel (%p72) target = $region12
      $region11: #{tpu_custom_call.1} parent=5 // pred_region
        %s76 = ssub.s32 %s10, 1
      $region12: #{tpu_custom_call.1} parent=5 // pred_fallthru
        _
      %p77 = scmp.lt.s32.totalorder %s10, 2
      // Predicated region
      $region13: #{tpu_custom_call.1} parent=5 // pred_check
        %p78 = pneg %p77
      $region14: #{tpu_custom_call.1} parent=5 // pred_check_branch
        %80 = sbr.rel (%p78) target = $region16
      $region15: #{tpu_custom_call.1} parent=5 // pred_region
        // Predicated region
        $region17: #{tpu_custom_call.1} parent=15 // pred_check
          %p81 = pneg %p30
        $region18: #{tpu_custom_call.1} parent=15 // pred_check_branch
          %83 = sbr.rel (%p81) target = $region20
        $region19: #{tpu_custom_call.1} parent=15 // pred_region
          %p84 = scmp.lt.s32.totalorder %s10, 1
          %s85 = scalar_select %p84, %s10, 1
          %s86 = smul.addr %s85, 4
          %s87 = smul.addr %s86, 8
          %s88 = scalar_lea.vmem %s0, %s87
        $region20: #{tpu_custom_call.1} parent=15 // pred_fallthru
          _
      $region16: #{tpu_custom_call.1} parent=5 // pred_fallthru
        _
      %p89 = scmp.le.s32.totalorder 1, %s10
      %p90 = scmp.lt.s32.totalorder %s10, 3
      %p91 = pnand %p89, %p90
      %p92 = pneg %p91
      // Predicated region
      $region21: #{tpu_custom_call.1} parent=5 // pred_check
        _
      $region22: #{tpu_custom_call.1} parent=5 // pred_check_branch
        %94 = sbr.rel (%p91) target = $region24
      $region23: #{tpu_custom_call.1} parent=5 // pred_region
        %s95 = ssub.s32 %s10, 1
        %p96 = scmp.lt.s32.totalorder %s15, 1
        %s97 = scalar_select %p96, %s15, 1
        %s98 = smul.addr %s97, 4
        %s99 = smul.addr %s98, 8
        %s100 = scalar_lea.vmem %s0, %s99
        %p101 = pneg %p36
        %p102 = pneg %p33
        %p103 = pneg %p62
        %p104 = pneg %p59
        %s105 = sand.u32 %s49, 1
        %s106 = scalar_lea.sflag [#allocation3], %s105
        %s107 = sand.u32 %s49, 1
        %s108 = smul.addr %s107, 64
        %s109 = scalar_lea.vmem [#allocation2], %s108
        %p110 = scmp.lt.s32.totalorder %s15, 1
        %s111 = scalar_select %p110, %s15, 1
        %s112 = smul.addr %s111, 4
        %s113 = smul.addr %s112, 8
        %s114 = scalar_lea.vmem %s0, %s113
        %s115 = smul.u32 4, %s15
        %v116 = vlaneseq
        %v117 = vand.u32 %v116, 127
        %v118 = vadd.s32 %v117, 128
        %v119 = vlaneseq
        %v120 = vshrl.u32 %v119, 7
        %v121 = vadd.s32 %v120, 8
        %v122 = vcvt.s32.f32 %v117
        %v123 = vcvt.s32.f32 %v118
        %v124 = vadd.f32 %v122, 0.5
        %v125 = vadd.f32 %v123, 0.5
        %v126 = vmul.f32 %v124, 0.0625
        %v127 = vmul.f32 %v125, 0.0625
        %v128 = vfloor.f32 %v126
        %v129 = vfloor.f32 %v127
        %v130 = vcvt.f32.s32.to.zero.pseudo %v128
        %v131 = vcvt.f32.s32.to.zero.pseudo %v129
        %p132 = scmp.eq.s32.totalorder %s15, 0
        %v133 = vmul.u32 %v130, 16
        %v134 = vmul.u32 %v131, 16
        %v135 = vsub.s32 %v117, %v133
        %v136 = vsub.s32 %v118, %v134
        %s137 = scalar_select %p132, 1, 0
        %v138 = vstv %s137
        %vm139 = vcmp.eq.s32.totalorder %v138, 1
        %v140 = vsel %vm139, %v135, %v130
        %v141 = vsel %vm139, %v136, %v131
        %vm142 = vcmp.eq.s32.totalorder %v140, %v120
        %vm143 = vcmp.eq.s32.totalorder %v141, %v120
        %vm144 = vcmp.eq.s32.totalorder %v140, %v121
        %vm145 = vcmp.eq.s32.totalorder %v141, %v121
        %v146 = vsel %vm142, 1.0, 0.0
        %v147 = vsel %vm143, 1.0, 0.0
        %v148 = vsel %vm144, 1.0, 0.0
        %v149 = vsel %vm145, 1.0, 0.0
        %v150 = vld [vmem:[%s114] sm:$0xff]
        %v151 = vld [vmem:[%s114 + $0x8] sm:$0xff]
        %v152 = vld [vmem:[%s114 + $0x10] sm:$0xff]
        %v153 = vld [vmem:[%s114 + $0x18] sm:$0xff]
        %vm154 = vcmask 130048
        %v156 = vsel %vm154, %v150, 0
        %v159 = vsel %vm154, %v151, 0
        %v162 = vsel %vm154, %v152, 0
        %v165 = vsel %vm154, %v153, 0
        %167 = vmatprep.subr.mxu0 0.0
        %168 = vmatpush1.msra.mxu0 0.0
        %169 = vmatprep.subr.mxu0 0.0
        %170 = vmatpush1.msra.mxu0 0.0
        %171 = vmatprep.subr.mxu0 0.0
        %172 = vmatpush1.msra.mxu0 0.0
        %173 = vmatprep.subr.mxu0 0.0
        %174 = vmatpush1.msra.mxu0 0.0
        %175 = vmatprep.subr.mxu0 0.0
        %176 = vmatpush1.msra.mxu0 0.0
        %177 = vmatprep.subr.mxu0 0.0
        %178 = vmatpush1.msra.mxu0 0.0
        %179 = vmatprep.subr.mxu0 0.0
        %180 = vmatpush1.msra.mxu0 0.0
        %181 = vmatprep.subr.mxu0 0.0
        %182 = vmatpush1.msra.mxu0 0.0
        %183 = vmatprep.subr.mxu0 0.0
        %184 = vmatpush1.msra.mxu0 0.0
        %185 = vmatprep.subr.mxu0 0.0
        %186 = vmatpush1.msra.mxu0 0.0
        %187 = vmatprep.subr.mxu0 0.0
        %188 = vmatpush1.msra.mxu0 0.0
        %189 = vmatprep.subr.mxu0 0.0
        %190 = vmatpush1.msra.mxu0 0.0
        %191 = vmatprep.subr.mxu0 0.0
        %192 = vmatpush1.msra.mxu0 0.0
        %193 = vmatprep.subr.mxu0 0.0
        %194 = vmatpush1.msra.mxu0 0.0
        %195 = vmatprep.subr.mxu0 %v149
        %196 = vmatpush1.msra.mxu0 %v148
        %197 = vmatprep.subr.mxu0 %v147
        %198 = vmatpush1.msra.mxu0 %v146
        %199 = vmatprep.subr.mxu0 0.0
        %200 = vmatpush2.msra.mxu0 0.0
        %201 = vmatprep.subr.mxu0 0.0
        %202 = vmatpush2.msra.mxu0 0.0
        %203 = vmatprep.subr.mxu0 0.0
        %204 = vmatpush2.msra.mxu0 0.0
        %205 = vmatprep.subr.mxu0 0.0
        %206 = vmatpush2.msra.mxu0 0.0
        %207 = vmatprep.subr.mxu0 0.0
        %208 = vmatpush2.msra.mxu0 0.0
        %209 = vmatprep.subr.mxu0 0.0
        %210 = vmatpush2.msra.mxu0 0.0
        %211 = vmatprep.subr.mxu0 0.0
        %212 = vmatpush2.msra.mxu0 0.0
        %213 = vmatprep.subr.mxu0 0.0
        %214 = vmatpush2.msra.mxu0 0.0
        %215 = vmatprep.subr.mxu0 0.0
        %216 = vmatpush2.msra.mxu0 0.0
        %217 = vmatprep.subr.mxu0 0.0
        %218 = vmatpush2.msra.mxu0 0.0
        %219 = vmatprep.subr.mxu0 0.0
        %220 = vmatpush2.msra.mxu0 0.0
        %221 = vmatprep.subr.mxu0 0.0
        %222 = vmatpush2.msra.mxu0 0.0
        %223 = vmatprep.subr.mxu0 0.0
        %224 = vmatpush2.msra.mxu0 0.0
        %225 = vmatprep.subr.mxu0 0.0
        %226 = vmatpush2.msra.mxu0 0.0
        %227 = vmatprep.subr.mxu0 0.0
        %228 = vmatpush2.msra.mxu0 0.0
        %229 = vmatprep.subr.mxu0 0.0
        %230 = vmatpush2.msra.mxu0 0.0
        %231 = vmatprep.mubr.f32.mxu0 0.0
        %232 = vmatmul.mubr.f32.gmra.mxu0 %v156
        %v233 = vpop.f32.mrf.mxu0
        %v234 = vadd.f32 0.0, %v233
        %v235 = vpop.f32.mrf.mxu0
        %v236 = vadd.f32 0.0, %v235
        %237 = vmatprep.mubr.f32.mxu0 0.0
        %238 = vmatmul.mubr.f32.gmra.mxu0 %v159
        %v239 = vpop.f32.mrf.mxu0
        %v240 = vadd.f32 0.0, %v239
        %v241 = vpop.f32.mrf.mxu0
        %v242 = vadd.f32 0.0, %v241
        %243 = vmatprep.mubr.f32.mxu0 0.0
        %244 = vmatmul.mubr.f32.gmra.mxu0 %v162
        %v245 = vpop.f32.mrf.mxu0
        %v246 = vadd.f32 0.0, %v245
        %v247 = vpop.f32.mrf.mxu0
        %v248 = vadd.f32 0.0, %v247
        %249 = vmatprep.mubr.f32.mxu0 0.0
        %250 = vmatmul.mubr.f32.gmra.mxu0 %v165
        %v251 = vpop.f32.mrf.mxu0
        %v252 = vadd.f32 0.0, %v251
        %v253 = vpop.f32.mrf.mxu0
        %v254 = vadd.f32 0.0, %v253
        %255 = vdwg.mxu0
        %256 = vst [vmem:[%s109] sm:$0xff] %v234
        %257 = vst [vmem:[%s109 + $0x8] sm:$0xff] %v236
        %258 = vst [vmem:[%s109 + $0x10] sm:$0xff] %v240
        %259 = vst [vmem:[%s109 + $0x18] sm:$0xff] %v242
        %260 = vst [vmem:[%s109 + $0x20] sm:$0xff] %v246
        %261 = vst [vmem:[%s109 + $0x28] sm:$0xff] %v248
        %262 = vst [vmem:[%s109 + $0x30] sm:$0xff] %v252
        %263 = vst [vmem:[%s109 + $0x38] sm:$0xff] %v254
        %s264 = sand.u32 %s49, 1
        %s265 = scalar_lea.sflag [#allocation3], %s264
        %s266 = sand.u32 %s49, 1
        %s267 = smul.addr %s266, 64
        %s268 = scalar_lea.vmem [#allocation2], %s267
        // Predicated region
        $region25: #{tpu_custom_call.1} parent=23 // pred_check
          %p269 = pneg %p59
        $region26: #{tpu_custom_call.1} parent=23 // pred_check_branch
          %271 = sbr.rel (%p269) target = $region28
        $region27: #{tpu_custom_call.1} parent=23 // pred_region
          %s272 = smul.u32 4, %s15
          %s274 = ssub.s32 1024, 1024
          %275 = vsyncadd %s265, %s274
          %s276 = smul.addr %s272, 2
          %s277 = smul.addr %s276, 128
          %s278 = scalar_lea.hbm %s1, %s277
          %s279 = sshll.u32 %s268, 4
          %s280 = int_to_ptr.vmem [resolvable:$true] %s279
          %285 = dma.vmem_to_hbm [thread:$0]  %s280, 1024, %s278, %s265, 256, 256, 16
        $region28: #{tpu_custom_call.1} parent=23 // pred_fallthru
          _
      $region24: #{tpu_custom_call.1} parent=5 // pred_fallthru
        _
      %p286 = scmp.le.s32.totalorder 2, %s10
      // Predicated region
      $region29: #{tpu_custom_call.1} parent=5 // pred_check
        %p287 = pneg %p286
      $region30: #{tpu_custom_call.1} parent=5 // pred_check_branch
        %289 = sbr.rel (%p287) target = $region32
      $region31: #{tpu_custom_call.1} parent=5 // pred_region
        %s290 = ssub.s32 %s10, 2
        // Predicated region
        $region33: #{tpu_custom_call.1} parent=31 // pred_check
          %p291 = pneg %p65
        $region34: #{tpu_custom_call.1} parent=31 // pred_check_branch
          %293 = sbr.rel (%p291) target = $region36
        $region35: #{tpu_custom_call.1} parent=31 // pred_region
          %s294 = sand.u32 %s50, 1
          %s295 = scalar_lea.sflag [#allocation3], %s294
          %s296 = sand.u32 %s50, 1
          %s297 = smul.addr %s296, 64
          %s298 = scalar_lea.vmem [#allocation2], %s297
          %299 = dma.done %s295, 1024
        $region36: #{tpu_custom_call.1} parent=31 // pred_fallthru
          _
      $region32: #{tpu_custom_call.1} parent=5 // pred_fallthru
        _
    $region6: #{tpu_custom_call.1} parent=1 // loop_footer
      %s14 = sadd.s32 1, %s10
    $region7: #{tpu_custom_call.1} parent=1 // loop_footer_branch
      %9 = sbr.rel target = $region3
    $region8: #{tpu_custom_call.1} parent=1 // loop_exit
      _
    %300 = vsyncpa [#allocation3], 1
    %s301 = scalar_lea.sflag [#allocation3], 1
    %302 = vsyncpa %s301, 1

</llo_original>
